<compile_context>
chip_gen: v7x
topology: tpu7x:2x2x1
jax: 0.10.0
libtpu: 0.0.40
codegen_flags: <defaults>
</compile_context>

<pallas_src>
import jax
import jax.numpy as jnp
from jax.experimental import pallas as pl
from jax.experimental.pallas import tpu as pltpu


def _round_up(n, m):
    return ((n + m - 1) // m) * m


# ---------------------------------------------------------------------------
# Parameter folding (done once, outside the kernel).
# ---------------------------------------------------------------------------
def transform_params(params, g_pad=8, final_lane_pad=128):
    """params: list of (centers [G,Din], stds [G,Din], weights [G,Dout]).

    Returns list of (A [Din,Gp], Bm [Din,Gp], c0 [1,Gp], W [Gp,Dout(_pad)])
    in float32, with G padded to a multiple of `g_pad` (zero weight rows so the
    padding contributes exactly 0) and the FINAL layer's Dout padded to a
    multiple of `final_lane_pad` for lane-dense output stores.
    """
    num_layers = len(params)
    fused = []
    for idx, (c, s, w) in enumerate(params):
        c = c.astype(jnp.float32)
        s = s.astype(jnp.float32)
        w = w.astype(jnp.float32)

        inv_s2 = 1.0 / (s * s)                                  # (G, Din)
        a = jnp.transpose(-0.5 * inv_s2)                        # (Din, G)
        bm = jnp.transpose(c * inv_s2)                          # (Din, G)
        c0 = (-0.5 * jnp.sum(c * c * inv_s2, axis=1))[None, :]  # (1, G)

        g, d_out = w.shape
        gp = _round_up(g, g_pad)
        if gp != g:
            a = jnp.pad(a, ((0, 0), (0, gp - g)))
            bm = jnp.pad(bm, ((0, 0), (0, gp - g)))
            c0 = jnp.pad(c0, ((0, 0), (0, gp - g)))
            w = jnp.pad(w, ((0, gp - g), (0, 0)))   # zero rows -> contributes 0

        if idx == num_layers - 1:
            dp = _round_up(d_out, final_lane_pad)
            if dp != d_out:
                w = jnp.pad(w, ((0, 0), (0, dp - d_out)))

        fused.append((a, bm, c0, w))
    return fused


# ---------------------------------------------------------------------------
# Fused multi-layer kernel.
# ---------------------------------------------------------------------------
def _make_fused_kan_kernel(num_layers, base_activation):
    def kernel(x_ref, *refs):
        # refs = [A0, Bm0, c00, W0, A1, Bm1, c01, W1, ..., o_ref]
        o_ref = refs[-1]
        h = x_ref[...].astype(jnp.float32)
        for layer in range(num_layers):
            a_ref, bm_ref, c0_ref, w_ref = refs[4 * layer: 4 * layer + 4]
            exponent = (
                jnp.dot(h * h, a_ref[...], preferred_element_type=jnp.float32)
                + jnp.dot(h, bm_ref[...], preferred_element_type=jnp.float32)
                + c0_ref[...]
            )
            gaussians = jnp.exp(exponent)                       # (tb, Gp)
            h = jnp.dot(gaussians, w_ref[...],
                        preferred_element_type=jnp.float32)     # (tb, Dout)
            if base_activation is not None:
                h = base_activation(h)
        o_ref[...] = h.astype(o_ref.dtype)

    return kernel


def kan_forward(x, fused_params, out_dim, base_activation=None, *,
                max_batch_tile=512, vmem_limit_bytes=32 * 1024 * 1024):
    """Fused GaussianKAN forward: x [B, D_in0] -> y [B, out_dim]."""
    b, d_in = x.shape
    num_layers = len(fused_params)
    d_out_padded = fused_params[-1][3].shape[1]

    # Batch tile: multiple of 8 sublanes, large enough to feed the MXU and
    # pipeline DMAs; pad the batch so no trailing rows are dropped.
    tb = min(max_batch_tile, _round_up(b, 8))
    b_pad = _round_up(b, tb)
    if b_pad != b:
        x = jnp.pad(x, ((0, b_pad - b), (0, 0)))
    grid = (b_pad // tb,)

    in_specs = [pl.BlockSpec((tb, d_in), lambda i: (i, 0))]
    flat_params = []
    for layer_params in fused_params:
        for p in layer_params:
            flat_params.append(p)
            # Parameters are small and replicated across batch tiles.
            in_specs.append(pl.BlockSpec(p.shape, lambda i: (0, 0)))

    kernel = _make_fused_kan_kernel(num_layers, base_activation)

    out = pl.pallas_call(
        kernel,
        out_shape=jax.ShapeDtypeStruct((b_pad, d_out_padded), x.dtype),
        grid_spec=pltpu.PrefetchScalarGridSpec(
            num_scalar_prefetch=0,
            grid=grid,
            in_specs=in_specs,
            out_specs=pl.BlockSpec((tb, d_out_padded), lambda i: (i, 0)),
        ),
        compiler_params=pltpu.CompilerParams(
            dimension_semantics=("parallel",),
            vmem_limit_bytes=vmem_limit_bytes,   # safe on v5e/v6e/v7x
        ),
    )(x, *flat_params)

    return out[:b, :out_dim]


# ---------------------------------------------------------------------------
# Module wrapper (JAX/Pallas port of the PyTorch KAN).
# ---------------------------------------------------------------------------
class KAN:
    def __init__(self, layers_hidden, num_gaussians=5, base_activation=None,
                 key=None, dtype=jnp.float32):
        if key is None:
            key = jax.random.PRNGKey(0)
        self.base_activation = base_activation
        self.out_dim = layers_hidden[-1]
        params = []
        for in_f, out_f in zip(layers_hidden, layers_hidden[1:]):
            key, kc, ks, kw = jax.random.split(key, 4)
            centers = jax.random.normal(kc, (num_gaussians, in_f), dtype)
            stds = jnp.abs(jax.random.normal(ks, (num_gaussians, in_f), dtype))
            weights = jax.random.normal(kw, (num_gaussians, out_f), dtype)
            params.append((centers, stds, weights))
        self.set_params(params)

    def set_params(self, params):
        """Install raw (centers, stds, weights) and fold them once."""
        self.params = list(params)
        self.fused_params = transform_params(self.params)

    def __call__(self, x):
        return kan_forward(x, self.fused_params, self.out_dim,
                           self.base_activation)


# ---------------------------------------------------------------------------
# Pure-JAX reference mirroring the PyTorch code line-by-line.
# ---------------------------------------------------------------------------
def _reference_forward(x, params, base_activation=None):
    for centers, stds, weights in params:
        diff = x[:, None, :] - centers[None, :, :]
        exponent = -0.5 * (diff / stds[None, :, :]) ** 2
        gaussians = jnp.exp(jnp.sum(exponent, axis=2))
        x = jnp.matmul(gaussians, weights)
        if base_activation is not None:
            x = base_activation(x)
    return x


if __name__ == "__main__":
    key = jax.random.PRNGKey(0)
    k_in, k_model, k_std = jax.random.split(key, 3)

    batch = 8
    layers_hidden = [32, 64, 16]
    num_gaussians = 5

    x = jax.random.normal(k_in, (batch, layers_hidden[0]), jnp.float32)

    model = KAN(layers_hidden, num_gaussians=num_gaussians,
                base_activation=None, key=k_model)

    # Widen the stds in the demo so the Gaussian basis is well conditioned and
    # the numerical comparison actually exercises the math (with raw |randn|
    # stds every exponent underflows and the outputs are ~0 everywhere).
    # Forward-pass semantics are unchanged; only the demo parameters differ.
    conditioned = []
    for (c, s, w), ks in zip(model.params,
                             jax.random.split(k_std, len(model.params))):
        s_wide = 3.0 + jnp.abs(jax.random.normal(ks, s.shape, s.dtype))
        conditioned.append((c, s_wide, w))
    model.set_params(conditioned)

    y = model(x)
    y = jax.block_until_ready(y)

    y_ref = _reference_forward(x, model.params, base_activation=None)

    assert y.shape == (batch, layers_hidden[-1])
    # Slightly relaxed tolerance: the completed-square reformulation rounds
    # differently than diff-then-square (see perf review correctness note).
    assert jnp.allclose(y, y_ref, rtol=1e-3, atol=1e-6), (
        "mismatch vs reference: max abs diff = "
        f"{float(jnp.max(jnp.abs(y - y_ref)))}")

    print("KERNEL_OK")
</pallas_src>

<mosaic_0001>
module attributes {stable_mosaic.version = 11 : i64} {
  func.func @kernel(%arg0: i32, %arg1: memref<8x32xf32, #tpu.memory_space<vmem>>, %arg2: memref<32x8xf32, #tpu.memory_space<vmem>>, %arg3: memref<32x8xf32, #tpu.memory_space<vmem>>, %arg4: memref<1x8xf32, #tpu.memory_space<vmem>>, %arg5: memref<8x64xf32, #tpu.memory_space<vmem>>, %arg6: memref<64x8xf32, #tpu.memory_space<vmem>>, %arg7: memref<64x8xf32, #tpu.memory_space<vmem>>, %arg8: memref<1x8xf32, #tpu.memory_space<vmem>>, %arg9: memref<8x128xf32, #tpu.memory_space<vmem>>, %arg10: memref<8x128xf32, #tpu.memory_space<vmem>>) attributes {dimension_semantics = [#tpu.dimension_semantics<parallel>], iteration_bounds = array<i64: 1>, scalar_prefetch = 0 : i64, scratch_operands = 0 : i64, tpu.core_type = #tpu.core_type<tc>, window_params = [{transform_indices = @transform_0, window_bounds = array<i64: 8, 32>}, {pipeline_mode = #tpu.pipeline_mode<synchronous>, transform_indices = @transform_1, window_bounds = array<i64: 32, 8>}, {pipeline_mode = #tpu.pipeline_mode<synchronous>, transform_indices = @transform_2, window_bounds = array<i64: 32, 8>}, {pipeline_mode = #tpu.pipeline_mode<synchronous>, transform_indices = @transform_3, window_bounds = array<i64: 1, 8>}, {pipeline_mode = #tpu.pipeline_mode<synchronous>, transform_indices = @transform_4, window_bounds = array<i64: 8, 64>}, {pipeline_mode = #tpu.pipeline_mode<synchronous>, transform_indices = @transform_5, window_bounds = array<i64: 64, 8>}, {pipeline_mode = #tpu.pipeline_mode<synchronous>, transform_indices = @transform_6, window_bounds = array<i64: 64, 8>}, {pipeline_mode = #tpu.pipeline_mode<synchronous>, transform_indices = @transform_7, window_bounds = array<i64: 1, 8>}, {pipeline_mode = #tpu.pipeline_mode<synchronous>, transform_indices = @transform_8, window_bounds = array<i64: 8, 128>}, {transform_indices = @transform_9, window_bounds = array<i64: 8, 128>}]} {
    %c0 = arith.constant 0 : index
    %c0_0 = arith.constant 0 : index
    %0 = vector.load %arg1[%c0, %c0_0] : memref<8x32xf32, #tpu.memory_space<vmem>>, vector<8x32xf32>
    %1 = arith.mulf %0, %0 : vector<8x32xf32>
    %c0_1 = arith.constant 0 : index
    %c0_2 = arith.constant 0 : index
    %2 = vector.load %arg2[%c0_1, %c0_2] : memref<32x8xf32, #tpu.memory_space<vmem>>, vector<32x8xf32>
    %cst = arith.constant dense<0.000000e+00> : vector<8x8xf32>
    %3 = tpu.matmul %1, %2, %cst {dimension_numbers = #tpu.dot_dimension_numbers<[1], [0], [0], [1], [0, 0, 1, 1], [], []>} : vector<8x32xf32>, vector<32x8xf32>, vector<8x8xf32> -> vector<8x8xf32>
    %c0_3 = arith.constant 0 : index
    %c0_4 = arith.constant 0 : index
    %4 = vector.load %arg3[%c0_3, %c0_4] : memref<32x8xf32, #tpu.memory_space<vmem>>, vector<32x8xf32>
    %cst_5 = arith.constant dense<0.000000e+00> : vector<8x8xf32>
    %5 = tpu.matmul %0, %4, %cst_5 {dimension_numbers = #tpu.dot_dimension_numbers<[1], [0], [0], [1], [0, 0, 1, 1], [], []>} : vector<8x32xf32>, vector<32x8xf32>, vector<8x8xf32> -> vector<8x8xf32>
    %6 = arith.addf %3, %5 : vector<8x8xf32>
    %c0_6 = arith.constant 0 : index
    %c0_7 = arith.constant 0 : index
    %7 = vector.load %arg4[%c0_6, %c0_7] : memref<1x8xf32, #tpu.memory_space<vmem>>, vector<1x8xf32>
    %8 = vector.broadcast %7 : vector<1x8xf32> to vector<8x8xf32>
    %9 = arith.addf %6, %8 : vector<8x8xf32>
    %10 = math.exp %9 : vector<8x8xf32>
    %c0_8 = arith.constant 0 : index
    %c0_9 = arith.constant 0 : index
    %11 = vector.load %arg5[%c0_8, %c0_9] : memref<8x64xf32, #tpu.memory_space<vmem>>, vector<8x64xf32>
    %cst_10 = arith.constant dense<0.000000e+00> : vector<8x64xf32>
    %12 = tpu.matmul %10, %11, %cst_10 {dimension_numbers = #tpu.dot_dimension_numbers<[1], [0], [0], [1], [0, 0, 1, 1], [], []>} : vector<8x8xf32>, vector<8x64xf32>, vector<8x64xf32> -> vector<8x64xf32>
    %13 = arith.mulf %12, %12 : vector<8x64xf32>
    %c0_11 = arith.constant 0 : index
    %c0_12 = arith.constant 0 : index
    %14 = vector.load %arg6[%c0_11, %c0_12] : memref<64x8xf32, #tpu.memory_space<vmem>>, vector<64x8xf32>
    %cst_13 = arith.constant dense<0.000000e+00> : vector<8x8xf32>
    %15 = tpu.matmul %13, %14, %cst_13 {dimension_numbers = #tpu.dot_dimension_numbers<[1], [0], [0], [1], [0, 0, 1, 1], [], []>} : vector<8x64xf32>, vector<64x8xf32>, vector<8x8xf32> -> vector<8x8xf32>
    %c0_14 = arith.constant 0 : index
    %c0_15 = arith.constant 0 : index
    %16 = vector.load %arg7[%c0_14, %c0_15] : memref<64x8xf32, #tpu.memory_space<vmem>>, vector<64x8xf32>
    %cst_16 = arith.constant dense<0.000000e+00> : vector<8x8xf32>
    %17 = tpu.matmul %12, %16, %cst_16 {dimension_numbers = #tpu.dot_dimension_numbers<[1], [0], [0], [1], [0, 0, 1, 1], [], []>} : vector<8x64xf32>, vector<64x8xf32>, vector<8x8xf32> -> vector<8x8xf32>
    %18 = arith.addf %15, %17 : vector<8x8xf32>
    %c0_17 = arith.constant 0 : index
    %c0_18 = arith.constant 0 : index
    %19 = vector.load %arg8[%c0_17, %c0_18] : memref<1x8xf32, #tpu.memory_space<vmem>>, vector<1x8xf32>
    %20 = vector.broadcast %19 : vector<1x8xf32> to vector<8x8xf32>
    %21 = arith.addf %18, %20 : vector<8x8xf32>
    %22 = math.exp %21 : vector<8x8xf32>
    %c0_19 = arith.constant 0 : index
    %c0_20 = arith.constant 0 : index
    %23 = vector.load %arg9[%c0_19, %c0_20] : memref<8x128xf32, #tpu.memory_space<vmem>>, vector<8x128xf32>
    %cst_21 = arith.constant dense<0.000000e+00> : vector<8x128xf32>
    %24 = tpu.matmul %22, %23, %cst_21 {dimension_numbers = #tpu.dot_dimension_numbers<[1], [0], [0], [1], [0, 0, 1, 1], [], []>} : vector<8x8xf32>, vector<8x128xf32>, vector<8x128xf32> -> vector<8x128xf32>
    %c0_22 = arith.constant 0 : index
    %c0_23 = arith.constant 0 : index
    %25 = vector.load %arg10[%c0_22, %c0_23] : memref<8x128xf32, #tpu.memory_space<vmem>>, vector<8x128xf32>
    tpu.vector_store %arg10[%c0_22, %c0_23], %24 {strides = array<i32>} : memref<8x128xf32, #tpu.memory_space<vmem>>, vector<8x128xf32>,
    return
  }
  func.func @transform_0(%arg0: i32) -> (i32, i32) {
    %c0_i32 = arith.constant 0 : i32
    %c0_i32_0 = arith.constant 0 : i32
    return %arg0, %c0_i32 : i32, i32
  }
  func.func @transform_1(%arg0: i32) -> (i32, i32) {
    %c0_i32 = arith.constant 0 : i32
    %c0_i32_0 = arith.constant 0 : i32
    %c0_i32_1 = arith.constant 0 : i32
    return %c0_i32, %c0_i32_0 : i32, i32
  }
  func.func @transform_2(%arg0: i32) -> (i32, i32) {
    %c0_i32 = arith.constant 0 : i32
    %c0_i32_0 = arith.constant 0 : i32
    %c0_i32_1 = arith.constant 0 : i32
    return %c0_i32, %c0_i32_0 : i32, i32
  }
  func.func @transform_3(%arg0: i32) -> (i32, i32) {
    %c0_i32 = arith.constant 0 : i32
    %c0_i32_0 = arith.constant 0 : i32
    %c0_i32_1 = arith.constant 0 : i32
    return %c0_i32, %c0_i32_0 : i32, i32
  }
  func.func @transform_4(%arg0: i32) -> (i32, i32) {
    %c0_i32 = arith.constant 0 : i32
    %c0_i32_0 = arith.constant 0 : i32
    %c0_i32_1 = arith.constant 0 : i32
    return %c0_i32, %c0_i32_0 : i32, i32
  }
  func.func @transform_5(%arg0: i32) -> (i32, i32) {
    %c0_i32 = arith.constant 0 : i32
    %c0_i32_0 = arith.constant 0 : i32
    %c0_i32_1 = arith.constant 0 : i32
    return %c0_i32, %c0_i32_0 : i32, i32
  }
  func.func @transform_6(%arg0: i32) -> (i32, i32) {
    %c0_i32 = arith.constant 0 : i32
    %c0_i32_0 = arith.constant 0 : i32
    %c0_i32_1 = arith.constant 0 : i32
    return %c0_i32, %c0_i32_0 : i32, i32
  }
  func.func @transform_7(%arg0: i32) -> (i32, i32) {
    %c0_i32 = arith.constant 0 : i32
    %c0_i32_0 = arith.constant 0 : i32
    %c0_i32_1 = arith.constant 0 : i32
    return %c0_i32, %c0_i32_0 : i32, i32
  }
  func.func @transform_8(%arg0: i32) -> (i32, i32) {
    %c0_i32 = arith.constant 0 : i32
    %c0_i32_0 = arith.constant 0 : i32
    %c0_i32_1 = arith.constant 0 : i32
    return %c0_i32, %c0_i32_0 : i32, i32
  }
  func.func @transform_9(%arg0: i32) -> (i32, i32) {
    %c0_i32 = arith.constant 0 : i32
    %c0_i32_0 = arith.constant 0 : i32
    return %arg0, %c0_i32 : i32, i32
  }
}

</mosaic_0001>

<llo_original>
// kernel: tpu_custom_call.1
$region0: #{tpu_custom_call.1}
  #allocation0 [shape = 'u32[]', space=smem, size = 0x4, offset = 0x4, fixed_abs, tag = 'smem constant byte address 0x4 - core index']
  #allocation1 [shape = 'u32[144,128]{1,0:T(1,128)}', space=vmem, size = 0x12000, scoped, tag = 'internal scratch']
  %s0 = inlined_call_operand.vmem [shape: f32[8,32], index: 0, kind: input, shape index: {}]
  %s1 = inlined_call_operand.vmem [shape: f32[32,8], index: 1, kind: input, shape index: {}]
  %s2 = inlined_call_operand.vmem [shape: f32[32,8], index: 2, kind: input, shape index: {}]
  %s3 = inlined_call_operand.vmem [shape: f32[1,8], index: 3, kind: input, shape index: {}]
  %s4 = inlined_call_operand.vmem [shape: f32[8,64], index: 4, kind: input, shape index: {}]
  %s5 = inlined_call_operand.vmem [shape: f32[64,8], index: 5, kind: input, shape index: {}]
  %s6 = inlined_call_operand.vmem [shape: f32[64,8], index: 6, kind: input, shape index: {}]
  %s7 = inlined_call_operand.vmem [shape: f32[1,8], index: 7, kind: input, shape index: {}]
  %s8 = inlined_call_operand.vmem [shape: f32[8,128], index: 8, kind: input, shape index: {}]
  %s9 = inlined_call_operand.hbm [shape: f32[8,128], index: 9, kind: output, shape index: {}]
  %s10 = sld [smem:[#allocation0]]
  $region46: #{tpu_custom_call.1} parent=0
    _
  %s12 = ssub.s32 1, %s10
  %s13 = scalar_select 0, %s12, %s10
  $region1: #{tpu_custom_call.1} parent=0
    #allocation2 [shape = 'u8[4096]{0}', space=vmem, size = 0x1000, scoped, tag = 'output window, operand 0, single buffered']
    #allocation3 [shape = 's32[1]{0}', space=sflag, size = 0x4, scoped, tag = 'scoped memory for tpu_custom_call.1']
    %14 = vsyncpa [#allocation3], 0
    // Predicated region
    $region2: #{tpu_custom_call.1} parent=1 // pred_check
      _
    $region3: #{tpu_custom_call.1} parent=1 // pred_check_branch
      %16 = sbr.rel (0) target = $region5
    $region4: #{tpu_custom_call.1} parent=1 // pred_region
      _
    $region5: #{tpu_custom_call.1} parent=1 // pred_fallthru
      _
    // Predicated region
    $region6: #{tpu_custom_call.1} parent=1 // pred_check
      _
    $region7: #{tpu_custom_call.1} parent=1 // pred_check_branch
      %18 = sbr.rel (0) target = $region9
    $region8: #{tpu_custom_call.1} parent=1 // pred_region
      _
    $region9: #{tpu_custom_call.1} parent=1 // pred_fallthru
      _
    // Predicated region
    $region10: #{tpu_custom_call.1} parent=1 // pred_check
      _
    $region11: #{tpu_custom_call.1} parent=1 // pred_check_branch
      %20 = sbr.rel (0) target = $region13
    $region12: #{tpu_custom_call.1} parent=1 // pred_region
      _
    $region13: #{tpu_custom_call.1} parent=1 // pred_fallthru
      _
    // Predicated region
    $region14: #{tpu_custom_call.1} parent=1 // pred_check
      _
    $region15: #{tpu_custom_call.1} parent=1 // pred_check_branch
      %22 = sbr.rel (0) target = $region17
    $region16: #{tpu_custom_call.1} parent=1 // pred_region
      _
    $region17: #{tpu_custom_call.1} parent=1 // pred_fallthru
      _
    // Predicated region
    $region18: #{tpu_custom_call.1} parent=1 // pred_check
      _
    $region19: #{tpu_custom_call.1} parent=1 // pred_check_branch
      %24 = sbr.rel (0) target = $region21
    $region20: #{tpu_custom_call.1} parent=1 // pred_region
      _
    $region21: #{tpu_custom_call.1} parent=1 // pred_fallthru
      _
    // Predicated region
    $region22: #{tpu_custom_call.1} parent=1 // pred_check
      _
    $region23: #{tpu_custom_call.1} parent=1 // pred_check_branch
      %26 = sbr.rel (0) target = $region25
    $region24: #{tpu_custom_call.1} parent=1 // pred_region
      _
    $region25: #{tpu_custom_call.1} parent=1 // pred_fallthru
      _
    // Predicated region
    $region26: #{tpu_custom_call.1} parent=1 // pred_check
      _
    $region27: #{tpu_custom_call.1} parent=1 // pred_check_branch
      %28 = sbr.rel (0) target = $region29
    $region28: #{tpu_custom_call.1} parent=1 // pred_region
      _
    $region29: #{tpu_custom_call.1} parent=1 // pred_fallthru
      _
    // Predicated region
    $region30: #{tpu_custom_call.1} parent=1 // pred_check
      _
    $region31: #{tpu_custom_call.1} parent=1 // pred_check_branch
      %30 = sbr.rel (0) target = $region33
    $region32: #{tpu_custom_call.1} parent=1 // pred_region
      _
    $region33: #{tpu_custom_call.1} parent=1 // pred_fallthru
      _
    // Predicated region
    $region34: #{tpu_custom_call.1} parent=1 // pred_check
      _
    $region35: #{tpu_custom_call.1} parent=1 // pred_check_branch
      %32 = sbr.rel (0) target = $region37
    $region36: #{tpu_custom_call.1} parent=1 // pred_region
      _
    $region37: #{tpu_custom_call.1} parent=1 // pred_fallthru
      _
    %v33 = vld [vmem:[%s0] sm:$0xff]
    %v34 = vmul.f32 %v33, %v33
    %v35 = vld [vmem:[%s1] sm:$0xff]
    %v36 = vld [vmem:[%s1 + $0x8] sm:$0xff]
    %v37 = vld [vmem:[%s1 + $0x10] sm:$0xff]
    %v38 = vld [vmem:[%s1 + $0x18] sm:$0xff]
    %v39 = vld [vmem:[%s2] sm:$0xff]
    %v40 = vld [vmem:[%s2 + $0x8] sm:$0xff]
    %v41 = vld [vmem:[%s2 + $0x10] sm:$0xff]
    %v42 = vld [vmem:[%s2 + $0x18] sm:$0xff]
    %vm43 = vcmask 261120
    %v45 = vsel %vm43, %v33, 0
    %47 = vmatprep.subr.mxu0 0.0
    %48 = vmatpush1.msra.mxu0 %v39
    %49 = vmatprep.subr.mxu0 0.0
    %50 = vmatpush1.msra.mxu0 %v40
    %51 = vmatprep.subr.mxu0 0.0
    %52 = vmatpush1.msra.mxu0 %v41
    %53 = vmatprep.subr.mxu0 0.0
    %54 = vmatpush1.msra.mxu0 %v42
    %55 = vmatprep.subr.mxu0 0.0
    %56 = vmatpush1.msra.mxu0 0.0
    %57 = vmatprep.subr.mxu0 0.0
    %58 = vmatpush1.msra.mxu0 0.0
    %59 = vmatprep.subr.mxu0 0.0
    %60 = vmatpush1.msra.mxu0 0.0
    %61 = vmatprep.subr.mxu0 0.0
    %62 = vmatpush1.msra.mxu0 0.0
    %63 = vmatprep.subr.mxu0 0.0
    %64 = vmatpush1.msra.mxu0 0.0
    %65 = vmatprep.subr.mxu0 0.0
    %66 = vmatpush1.msra.mxu0 0.0
    %67 = vmatprep.subr.mxu0 0.0
    %68 = vmatpush1.msra.mxu0 0.0
    %69 = vmatprep.subr.mxu0 0.0
    %70 = vmatpush1.msra.mxu0 0.0
    %71 = vmatprep.subr.mxu0 0.0
    %72 = vmatpush1.msra.mxu0 0.0
    %73 = vmatprep.subr.mxu0 0.0
    %74 = vmatpush1.msra.mxu0 0.0
    %75 = vmatprep.subr.mxu0 0.0
    %76 = vmatpush1.msra.mxu0 0.0
    %77 = vmatprep.subr.mxu0 0.0
    %78 = vmatpush1.msra.mxu0 0.0
    %79 = vmatprep.subr.mxu0 0.0
    %80 = vmatpush1.msra.mxu0 0.0
    %81 = vmatprep.subr.mxu0 0.0
    %82 = vmatpush1.msra.mxu0 0.0
    %83 = vmatprep.subr.mxu0 0.0
    %84 = vmatpush1.msra.mxu0 0.0
    %85 = vmatprep.subr.mxu0 0.0
    %86 = vmatpush1.msra.mxu0 0.0
    %87 = vmatprep.subr.mxu0 0.0
    %88 = vmatpush1.msra.mxu0 0.0
    %89 = vmatprep.subr.mxu0 0.0
    %90 = vmatpush1.msra.mxu0 0.0
    %91 = vmatprep.subr.mxu0 0.0
    %92 = vmatpush1.msra.mxu0 0.0
    %93 = vmatprep.subr.mxu0 0.0
    %94 = vmatpush1.msra.mxu0 0.0
    %95 = vmatprep.subr.mxu0 0.0
    %96 = vmatpush1.msra.mxu0 0.0
    %97 = vmatprep.subr.mxu0 0.0
    %98 = vmatpush1.msra.mxu0 0.0
    %99 = vmatprep.subr.mxu0 0.0
    %100 = vmatpush1.msra.mxu0 0.0
    %101 = vmatprep.subr.mxu0 0.0
    %102 = vmatpush1.msra.mxu0 0.0
    %103 = vmatprep.subr.mxu0 0.0
    %104 = vmatpush1.msra.mxu0 0.0
    %105 = vmatprep.subr.mxu0 0.0
    %106 = vmatpush1.msra.mxu0 0.0
    %107 = vmatprep.subr.mxu0 0.0
    %108 = vmatpush1.msra.mxu0 0.0
    %109 = vmatprep.subr.mxu0 0.0
    %110 = vmatpush1.msra.mxu0 0.0
    %111 = vmatprep.mubr.f32.mxu0 0.0
    %112 = vmatmul.mubr.f32.gmra.mrb[0].mxu0 %v45
    %v113 = vpop.f32.mrb[0].mxu0
    %v114 = vadd.f32 0.0, %v113
    %v115 = vpop.f32.mrb[0].mxu0
    %116 = vdwg.mxu0
    %v118 = vsel %vm43, %v34, 0
    %120 = vmatprep.subr.mxu0 0.0
    %121 = vmatpush1.msra.mxu0 %v35
    %122 = vmatprep.subr.mxu0 0.0
    %123 = vmatpush1.msra.mxu0 %v36
    %124 = vmatprep.subr.mxu0 0.0
    %125 = vmatpush1.msra.mxu0 %v37
    %126 = vmatprep.subr.mxu0 0.0
    %127 = vmatpush1.msra.mxu0 %v38
    %128 = vmatprep.subr.mxu0 0.0
    %129 = vmatpush1.msra.mxu0 0.0
    %130 = vmatprep.subr.mxu0 0.0
    %131 = vmatpush1.msra.mxu0 0.0
    %132 = vmatprep.subr.mxu0 0.0
    %133 = vmatpush1.msra.mxu0 0.0
    %134 = vmatprep.subr.mxu0 0.0
    %135 = vmatpush1.msra.mxu0 0.0
    %136 = vmatprep.subr.mxu0 0.0
    %137 = vmatpush1.msra.mxu0 0.0
    %138 = vmatprep.subr.mxu0 0.0
    %139 = vmatpush1.msra.mxu0 0.0
    %140 = vmatprep.subr.mxu0 0.0
    %141 = vmatpush1.msra.mxu0 0.0
    %142 = vmatprep.subr.mxu0 0.0
    %143 = vmatpush1.msra.mxu0 0.0
    %144 = vmatprep.subr.mxu0 0.0
    %145 = vmatpush1.msra.mxu0 0.0
    %146 = vmatprep.subr.mxu0 0.0
    %147 = vmatpush1.msra.mxu0 0.0
    %148 = vmatprep.subr.mxu0 0.0
    %149 = vmatpush1.msra.mxu0 0.0
    %150 = vmatprep.subr.mxu0 0.0
    %151 = vmatpush1.msra.mxu0 0.0
    %152 = vmatprep.subr.mxu0 0.0
    %153 = vmatpush1.msra.mxu0 0.0
    %154 = vmatprep.subr.mxu0 0.0
    %155 = vmatpush1.msra.mxu0 0.0
    %156 = vmatprep.subr.mxu0 0.0
    %157 = vmatpush1.msra.mxu0 0.0
    %158 = vmatprep.subr.mxu0 0.0
    %159 = vmatpush1.msra.mxu0 0.0
    %160 = vmatprep.subr.mxu0 0.0
    %161 = vmatpush1.msra.mxu0 0.0
    %162 = vmatprep.subr.mxu0 0.0
    %163 = vmatpush1.msra.mxu0 0.0
    %164 = vmatprep.subr.mxu0 0.0
    %165 = vmatpush1.msra.mxu0 0.0
    %166 = vmatprep.subr.mxu0 0.0
    %167 = vmatpush1.msra.mxu0 0.0
    %168 = vmatprep.subr.mxu0 0.0
    %169 = vmatpush1.msra.mxu0 0.0
    %170 = vmatprep.subr.mxu0 0.0
    %171 = vmatpush1.msra.mxu0 0.0
    %172 = vmatprep.subr.mxu0 0.0
    %173 = vmatpush1.msra.mxu0 0.0
    %174 = vmatprep.subr.mxu0 0.0
    %175 = vmatpush1.msra.mxu0 0.0
    %176 = vmatprep.subr.mxu0 0.0
    %177 = vmatpush1.msra.mxu0 0.0
    %178 = vmatprep.subr.mxu0 0.0
    %179 = vmatpush1.msra.mxu0 0.0
    %180 = vmatprep.subr.mxu0 0.0
    %181 = vmatpush1.msra.mxu0 0.0
    %182 = vmatprep.subr.mxu0 0.0
    %183 = vmatpush1.msra.mxu0 0.0
    %184 = vmatprep.mubr.f32.mxu0 0.0
    %185 = vmatmul.mubr.f32.gmra.mrb[0].mxu0 %v118
    %v186 = vpop.f32.mrb[0].mxu0
    %v187 = vadd.f32 %v114, %v186
    %v188 = vpop.f32.mrb[0].mxu0
    %189 = vdwg.mxu0
    %v190 = vld [vmem:[%s3] sm:$0x1]
    %v192 = vlaneseq
    %v193 = vshrl.u32 %v192, 7
    %v194 = vsub.s32 0, %v193
    %v195 = vrot.slane %v190, %v194
    %v197 = vadd.f32 %v187, %v195
    %v198 = vmul.f32 %v197, 1.442695
    %v199 = vpow.pop %v198
    %v200 = vld [vmem:[%s4] sm:$0xff]
    %vm201 = vcmask 64512
    %v203 = vsel %vm201, %v199, 0
    %205 = vmatprep.subr.mxu0 0.0
    %206 = vmatpush1.msra.mxu0 %v200
    %207 = vmatprep.subr.mxu0 0.0
    %208 = vmatpush1.msra.mxu0 0.0
    %209 = vmatprep.subr.mxu0 0.0
    %210 = vmatpush1.msra.mxu0 0.0
    %211 = vmatprep.subr.mxu0 0.0
    %212 = vmatpush1.msra.mxu0 0.0
    %213 = vmatprep.subr.mxu0 0.0
    %214 = vmatpush1.msra.mxu0 0.0
    %215 = vmatprep.subr.mxu0 0.0
    %216 = vmatpush1.msra.mxu0 0.0
    %217 = vmatprep.subr.mxu0 0.0
    %218 = vmatpush1.msra.mxu0 0.0
    %219 = vmatprep.subr.mxu0 0.0
    %220 = vmatpush1.msra.mxu0 0.0
    %221 = vmatprep.subr.mxu0 0.0
    %222 = vmatpush1.msra.mxu0 0.0
    %223 = vmatprep.subr.mxu0 0.0
    %224 = vmatpush1.msra.mxu0 0.0
    %225 = vmatprep.subr.mxu0 0.0
    %226 = vmatpush1.msra.mxu0 0.0
    %227 = vmatprep.subr.mxu0 0.0
    %228 = vmatpush1.msra.mxu0 0.0
    %229 = vmatprep.subr.mxu0 0.0
    %230 = vmatpush1.msra.mxu0 0.0
    %231 = vmatprep.subr.mxu0 0.0
    %232 = vmatpush1.msra.mxu0 0.0
    %233 = vmatprep.subr.mxu0 0.0
    %234 = vmatpush1.msra.mxu0 0.0
    %235 = vmatprep.subr.mxu0 0.0
    %236 = vmatpush1.msra.mxu0 0.0
    %237 = vmatprep.subr.mxu0 0.0
    %238 = vmatpush1.msra.mxu0 0.0
    %239 = vmatprep.subr.mxu0 0.0
    %240 = vmatpush1.msra.mxu0 0.0
    %241 = vmatprep.subr.mxu0 0.0
    %242 = vmatpush1.msra.mxu0 0.0
    %243 = vmatprep.subr.mxu0 0.0
    %244 = vmatpush1.msra.mxu0 0.0
    %245 = vmatprep.subr.mxu0 0.0
    %246 = vmatpush1.msra.mxu0 0.0
    %247 = vmatprep.subr.mxu0 0.0
    %248 = vmatpush1.msra.mxu0 0.0
    %249 = vmatprep.subr.mxu0 0.0
    %250 = vmatpush1.msra.mxu0 0.0
    %251 = vmatprep.subr.mxu0 0.0
    %252 = vmatpush1.msra.mxu0 0.0
    %253 = vmatprep.subr.mxu0 0.0
    %254 = vmatpush1.msra.mxu0 0.0
    %255 = vmatprep.subr.mxu0 0.0
    %256 = vmatpush1.msra.mxu0 0.0
    %257 = vmatprep.subr.mxu0 0.0
    %258 = vmatpush1.msra.mxu0 0.0
    %259 = vmatprep.subr.mxu0 0.0
    %260 = vmatpush1.msra.mxu0 0.0
    %261 = vmatprep.subr.mxu0 0.0
    %262 = vmatpush1.msra.mxu0 0.0
    %263 = vmatprep.subr.mxu0 0.0
    %264 = vmatpush1.msra.mxu0 0.0
    %265 = vmatprep.subr.mxu0 0.0
    %266 = vmatpush1.msra.mxu0 0.0
    %267 = vmatprep.subr.mxu0 0.0
    %268 = vmatpush1.msra.mxu0 0.0
    %269 = vmatprep.mubr.f32.mxu0 0.0
    %270 = vmatmul.mubr.f32.gmra.mrb[0].mxu0 %v203
    %v271 = vpop.f32.mrb[0].mxu0
    %v272 = vadd.f32 0.0, %v271
    %v273 = vpop.f32.mrb[0].mxu0
    %274 = vdwg.mxu0
    %v275 = vmul.f32 %v272, %v272
    %v276 = vld [vmem:[%s5] sm:$0xff]
    %v277 = vld [vmem:[%s5 + $0x8] sm:$0xff]
    %v278 = vld [vmem:[%s5 + $0x10] sm:$0xff]
    %v279 = vld [vmem:[%s5 + $0x18] sm:$0xff]
    %v280 = vld [vmem:[%s5 + $0x20] sm:$0xff]
    %v281 = vld [vmem:[%s5 + $0x28] sm:$0xff]
    %v282 = vld [vmem:[%s5 + $0x30] sm:$0xff]
    %v283 = vld [vmem:[%s5 + $0x38] sm:$0xff]
    %v284 = vld [vmem:[%s6] sm:$0xff]
    %v285 = vld [vmem:[%s6 + $0x8] sm:$0xff]
    %v286 = vld [vmem:[%s6 + $0x10] sm:$0xff]
    %v287 = vld [vmem:[%s6 + $0x18] sm:$0xff]
    %v288 = vld [vmem:[%s6 + $0x20] sm:$0xff]
    %v289 = vld [vmem:[%s6 + $0x28] sm:$0xff]
    %v290 = vld [vmem:[%s6 + $0x30] sm:$0xff]
    %v291 = vld [vmem:[%s6 + $0x38] sm:$0xff]
    %vm292 = vcmask 523264
    %v294 = vsel %vm292, %v272, 0
    %296 = vmatprep.subr.mxu0 0.0
    %297 = vmatpush1.msra.mxu0 %v284
    %298 = vmatprep.subr.mxu0 0.0
    %299 = vmatpush1.msra.mxu0 %v285
    %300 = vmatprep.subr.mxu0 0.0
    %301 = vmatpush1.msra.mxu0 %v286
    %302 = vmatprep.subr.mxu0 0.0
    %303 = vmatpush1.msra.mxu0 %v287
    %304 = vmatprep.subr.mxu0 0.0
    %305 = vmatpush1.msra.mxu0 %v288
    %306 = vmatprep.subr.mxu0 0.0
    %307 = vmatpush1.msra.mxu0 %v289
    %308 = vmatprep.subr.mxu0 0.0
    %309 = vmatpush1.msra.mxu0 %v290
    %310 = vmatprep.subr.mxu0 0.0
    %311 = vmatpush1.msra.mxu0 %v291
    %312 = vmatprep.subr.mxu0 0.0
    %313 = vmatpush1.msra.mxu0 0.0
    %314 = vmatprep.subr.mxu0 0.0
    %315 = vmatpush1.msra.mxu0 0.0
    %316 = vmatprep.subr.mxu0 0.0
    %317 = vmatpush1.msra.mxu0 0.0
    %318 = vmatprep.subr.mxu0 0.0
    %319 = vmatpush1.msra.mxu0 0.0
    %320 = vmatprep.subr.mxu0 0.0
    %321 = vmatpush1.msra.mxu0 0.0
    %322 = vmatprep.subr.mxu0 0.0
    %323 = vmatpush1.msra.mxu0 0.0
    %324 = vmatprep.subr.mxu0 0.0
    %325 = vmatpush1.msra.mxu0 0.0
    %326 = vmatprep.subr.mxu0 0.0
    %327 = vmatpush1.msra.mxu0 0.0
    %328 = vmatprep.subr.mxu0 0.0
    %329 = vmatpush1.msra.mxu0 0.0
    %330 = vmatprep.subr.mxu0 0.0
    %331 = vmatpush1.msra.mxu0 0.0
    %332 = vmatprep.subr.mxu0 0.0
    %333 = vmatpush1.msra.mxu0 0.0
    %334 = vmatprep.subr.mxu0 0.0
    %335 = vmatpush1.msra.mxu0 0.0
    %336 = vmatprep.subr.mxu0 0.0
    %337 = vmatpush1.msra.mxu0 0.0
    %338 = vmatprep.subr.mxu0 0.0
    %339 = vmatpush1.msra.mxu0 0.0
    %340 = vmatprep.subr.mxu0 0.0
    %341 = vmatpush1.msra.mxu0 0.0
    %342 = vmatprep.subr.mxu0 0.0
    %343 = vmatpush1.msra.mxu0 0.0
    %344 = vmatprep.subr.mxu0 0.0
    %345 = vmatpush1.msra.mxu0 0.0
    %346 = vmatprep.subr.mxu0 0.0
    %347 = vmatpush1.msra.mxu0 0.0
    %348 = vmatprep.subr.mxu0 0.0
    %349 = vmatpush1.msra.mxu0 0.0
    %350 = vmatprep.subr.mxu0 0.0
    %351 = vmatpush1.msra.mxu0 0.0
    %352 = vmatprep.subr.mxu0 0.0
    %353 = vmatpush1.msra.mxu0 0.0
    %354 = vmatprep.subr.mxu0 0.0
    %355 = vmatpush1.msra.mxu0 0.0
    %356 = vmatprep.subr.mxu0 0.0
    %357 = vmatpush1.msra.mxu0 0.0
    %358 = vmatprep.subr.mxu0 0.0
    %359 = vmatpush1.msra.mxu0 0.0
    %360 = vmatprep.mubr.f32.mxu0 0.0
    %361 = vmatmul.mubr.f32.gmra.mrb[0].mxu0 %v294
    %v362 = vpop.f32.mrb[0].mxu0
    %v363 = vadd.f32 0.0, %v362
    %v364 = vpop.f32.mrb[0].mxu0
    %365 = vdwg.mxu0
    %v367 = vsel %vm292, %v275, 0
    %369 = vmatprep.subr.mxu0 0.0
    %370 = vmatpush1.msra.mxu0 %v276
    %371 = vmatprep.subr.mxu0 0.0
    %372 = vmatpush1.msra.mxu0 %v277
    %373 = vmatprep.subr.mxu0 0.0
    %374 = vmatpush1.msra.mxu0 %v278
    %375 = vmatprep.subr.mxu0 0.0
    %376 = vmatpush1.msra.mxu0 %v279
    %377 = vmatprep.subr.mxu0 0.0
    %378 = vmatpush1.msra.mxu0 %v280
    %379 = vmatprep.subr.mxu0 0.0
    %380 = vmatpush1.msra.mxu0 %v281
    %381 = vmatprep.subr.mxu0 0.0
    %382 = vmatpush1.msra.mxu0 %v282
    %383 = vmatprep.subr.mxu0 0.0
    %384 = vmatpush1.msra.mxu0 %v283
    %385 = vmatprep.subr.mxu0 0.0
    %386 = vmatpush1.msra.mxu0 0.0
    %387 = vmatprep.subr.mxu0 0.0
    %388 = vmatpush1.msra.mxu0 0.0
    %389 = vmatprep.subr.mxu0 0.0
    %390 = vmatpush1.msra.mxu0 0.0
    %391 = vmatprep.subr.mxu0 0.0
    %392 = vmatpush1.msra.mxu0 0.0
    %393 = vmatprep.subr.mxu0 0.0
    %394 = vmatpush1.msra.mxu0 0.0
    %395 = vmatprep.subr.mxu0 0.0
    %396 = vmatpush1.msra.mxu0 0.0
    %397 = vmatprep.subr.mxu0 0.0
    %398 = vmatpush1.msra.mxu0 0.0
    %399 = vmatprep.subr.mxu0 0.0
    %400 = vmatpush1.msra.mxu0 0.0
    %401 = vmatprep.subr.mxu0 0.0
    %402 = vmatpush1.msra.mxu0 0.0
    %403 = vmatprep.subr.mxu0 0.0
    %404 = vmatpush1.msra.mxu0 0.0
    %405 = vmatprep.subr.mxu0 0.0
    %406 = vmatpush1.msra.mxu0 0.0
    %407 = vmatprep.subr.mxu0 0.0
    %408 = vmatpush1.msra.mxu0 0.0
    %409 = vmatprep.subr.mxu0 0.0
    %410 = vmatpush1.msra.mxu0 0.0
    %411 = vmatprep.subr.mxu0 0.0
    %412 = vmatpush1.msra.mxu0 0.0
    %413 = vmatprep.subr.mxu0 0.0
    %414 = vmatpush1.msra.mxu0 0.0
    %415 = vmatprep.subr.mxu0 0.0
    %416 = vmatpush1.msra.mxu0 0.0
    %417 = vmatprep.subr.mxu0 0.0
    %418 = vmatpush1.msra.mxu0 0.0
    %419 = vmatprep.subr.mxu0 0.0
    %420 = vmatpush1.msra.mxu0 0.0
    %421 = vmatprep.subr.mxu0 0.0
    %422 = vmatpush1.msra.mxu0 0.0
    %423 = vmatprep.subr.mxu0 0.0
    %424 = vmatpush1.msra.mxu0 0.0
    %425 = vmatprep.subr.mxu0 0.0
    %426 = vmatpush1.msra.mxu0 0.0
    %427 = vmatprep.subr.mxu0 0.0
    %428 = vmatpush1.msra.mxu0 0.0
    %429 = vmatprep.subr.mxu0 0.0
    %430 = vmatpush1.msra.mxu0 0.0
    %431 = vmatprep.subr.mxu0 0.0
    %432 = vmatpush1.msra.mxu0 0.0
    %433 = vmatprep.mubr.f32.mxu0 0.0
    %434 = vmatmul.mubr.f32.gmra.mrb[0].mxu0 %v367
    %v435 = vpop.f32.mrb[0].mxu0
    %v436 = vadd.f32 %v363, %v435
    %v437 = vpop.f32.mrb[0].mxu0
    %438 = vdwg.mxu0
    %v439 = vld [vmem:[%s7] sm:$0x1]
    %v441 = vlaneseq
    %v442 = vshrl.u32 %v441, 7
    %v443 = vsub.s32 0, %v442
    %v444 = vrot.slane %v439, %v443
    %v446 = vadd.f32 %v436, %v444
    %v447 = vmul.f32 %v446, 1.442695
    %v448 = vpow.pop %v447
    %v449 = vld [vmem:[%s8] sm:$0xff]
    %v451 = vsel %vm201, %v448, 0
    %453 = vmatprep.subr.mxu0 0.0
    %454 = vmatpush1.msra.mxu0 %v449
    %455 = vmatprep.subr.mxu0 0.0
    %456 = vmatpush1.msra.mxu0 0.0
    %457 = vmatprep.subr.mxu0 0.0
    %458 = vmatpush1.msra.mxu0 0.0
    %459 = vmatprep.subr.mxu0 0.0
    %460 = vmatpush1.msra.mxu0 0.0
    %461 = vmatprep.subr.mxu0 0.0
    %462 = vmatpush1.msra.mxu0 0.0
    %463 = vmatprep.subr.mxu0 0.0
    %464 = vmatpush1.msra.mxu0 0.0
    %465 = vmatprep.subr.mxu0 0.0
    %466 = vmatpush1.msra.mxu0 0.0
    %467 = vmatprep.subr.mxu0 0.0
    %468 = vmatpush1.msra.mxu0 0.0
    %469 = vmatprep.subr.mxu0 0.0
    %470 = vmatpush1.msra.mxu0 0.0
    %471 = vmatprep.subr.mxu0 0.0
    %472 = vmatpush1.msra.mxu0 0.0
    %473 = vmatprep.subr.mxu0 0.0
    %474 = vmatpush1.msra.mxu0 0.0
    %475 = vmatprep.subr.mxu0 0.0
    %476 = vmatpush1.msra.mxu0 0.0
    %477 = vmatprep.subr.mxu0 0.0
    %478 = vmatpush1.msra.mxu0 0.0
    %479 = vmatprep.subr.mxu0 0.0
    %480 = vmatpush1.msra.mxu0 0.0
    %481 = vmatprep.subr.mxu0 0.0
    %482 = vmatpush1.msra.mxu0 0.0
    %483 = vmatprep.subr.mxu0 0.0
    %484 = vmatpush1.msra.mxu0 0.0
    %485 = vmatprep.subr.mxu0 0.0
    %486 = vmatpush1.msra.mxu0 0.0
    %487 = vmatprep.subr.mxu0 0.0
    %488 = vmatpush1.msra.mxu0 0.0
    %489 = vmatprep.subr.mxu0 0.0
    %490 = vmatpush1.msra.mxu0 0.0
    %491 = vmatprep.subr.mxu0 0.0
    %492 = vmatpush1.msra.mxu0 0.0
    %493 = vmatprep.subr.mxu0 0.0
    %494 = vmatpush1.msra.mxu0 0.0
    %495 = vmatprep.subr.mxu0 0.0
    %496 = vmatpush1.msra.mxu0 0.0
    %497 = vmatprep.subr.mxu0 0.0
    %498 = vmatpush1.msra.mxu0 0.0
    %499 = vmatprep.subr.mxu0 0.0
    %500 = vmatpush1.msra.mxu0 0.0
    %501 = vmatprep.subr.mxu0 0.0
    %502 = vmatpush1.msra.mxu0 0.0
    %503 = vmatprep.subr.mxu0 0.0
    %504 = vmatpush1.msra.mxu0 0.0
    %505 = vmatprep.subr.mxu0 0.0
    %506 = vmatpush1.msra.mxu0 0.0
    %507 = vmatprep.subr.mxu0 0.0
    %508 = vmatpush1.msra.mxu0 0.0
    %509 = vmatprep.subr.mxu0 0.0
    %510 = vmatpush1.msra.mxu0 0.0
    %511 = vmatprep.subr.mxu0 0.0
    %512 = vmatpush1.msra.mxu0 0.0
    %513 = vmatprep.subr.mxu0 0.0
    %514 = vmatpush1.msra.mxu0 0.0
    %515 = vmatprep.subr.mxu0 0.0
    %516 = vmatpush1.msra.mxu0 0.0
    %517 = vmatprep.mubr.f32.mxu0 0.0
    %518 = vmatmul.mubr.f32.gmra.mrb[0].mxu0 %v451
    %v519 = vpop.f32.mrb[0].mxu0
    %v520 = vadd.f32 0.0, %v519
    %v521 = vpop.f32.mrb[0].mxu0
    %522 = vdwg.mxu0
    %523 = vst [vmem:[#allocation2] sm:$0xff] %v520
    // Predicated region
    $region38: #{tpu_custom_call.1} parent=1 // pred_check
      _
    $region39: #{tpu_custom_call.1} parent=1 // pred_check_branch
      %525 = sbr.rel (0) target = $region41
    $region40: #{tpu_custom_call.1} parent=1 // pred_region
      %s527 = ssub.s32 128, 128
      %528 = vsyncadd [#allocation3], %s527
      %s530 = sshll.u32 [#allocation2], 4
      %s531 = int_to_ptr.vmem [resolvable:$true] %s530
      %533 = dma.vmem_to_hbm [thread:$0]  %s531, 128, %s9, [#allocation3]
    $region41: #{tpu_custom_call.1} parent=1 // pred_fallthru
      _
    // Predicated region
    $region42: #{tpu_custom_call.1} parent=1 // pred_check
      _
    $region43: #{tpu_custom_call.1} parent=1 // pred_check_branch
      %535 = sbr.rel (0) target = $region45
    $region44: #{tpu_custom_call.1} parent=1 // pred_region
      %536 = dma.done [#allocation3], 128
    $region45: #{tpu_custom_call.1} parent=1 // pred_fallthru
      _
    %537 = vsyncpa [#allocation3], 1

</llo_original>
